<compile_context>
chip_gen: v7x
topology: tpu7x:2x2x1
jax: 0.10.0
libtpu: 0.0.40
codegen_flags: <defaults>
</compile_context>

<pallas_src>
import math
from functools import partial

import jax
import jax.numpy as jnp
from jax import lax
from jax.experimental import pallas as pl
from jax.experimental.pallas import tpu as pltpu

TOKEN_SELF_ATTN_VALUE = -50000.0


def _full_qk_attn_kernel(qk_ref, q_ref, v_ref, out_ref, dot_ref, kn_ref, *,
                         query_len, seq_len, dim, tq, causal):
    """One (batch, query-tile) grid step.

    qk_ref : (1, S, D)   full qk block, resident across the query-tile axis
    q_ref  : (1, Tq, D)  query tile (same underlying array as qk, un-normalized)
    v_ref  : (1, S, D)   full value block, resident across the query-tile axis
    out_ref: (1, Tq, D)
    dot_ref: (1, Tq, S)
    kn_ref : (S, D) VMEM scratch holding the L2-normalized (and dim**-0.5
             pre-scaled) keys, computed once per batch element and reused for
             every query tile.
    """
    qi = pl.program_id(1)

    # --- normalize + pre-scale keys once per batch element (hoisted) ---------
    @pl.when(qi == 0)
    def _():
        k = qk_ref[0].astype(jnp.float32)                      # (S, D)
        ssq = jnp.sum(k * k, axis=-1, keepdims=True)
        # rsqrt(max(||k||^2, 1e-24)) == 1 / max(||k||, 1e-12)  (F.normalize eps);
        # fold the softmax scale dim**-0.5 into the same multiply.
        inv = lax.rsqrt(jnp.maximum(ssq, 1e-24)) * jnp.float32(dim ** -0.5)
        kn_ref[...] = (k * inv).astype(kn_ref.dtype)

    # --- QK^T on the MXU (contract last dims; no explicit key transpose) -----
    s = lax.dot_general(q_ref[0], kn_ref[...],
                        dimension_numbers=(((1,), (1,)), ((), ())),
                        preferred_element_type=jnp.float32)    # (Tq, S)

    # --- masks: self-token on the diagonal + optional causal -----------------
    row = qi * tq + lax.broadcasted_iota(jnp.int32, (tq, seq_len), 0)
    col = lax.broadcasted_iota(jnp.int32, (tq, seq_len), 1)
    s = jnp.where(col == row, jnp.float32(TOKEN_SELF_ATTN_VALUE), s)
    if causal:
        masked_value = -jnp.finfo(jnp.float32).max
        s = jnp.where((col < query_len) & (col > row), masked_value, s)

    # TODO(synk): input_mask / input_attn_mask paths not implemented (None in this config).

    # --- softmax over keys (one reciprocal per row instead of Tq*S divides) --
    m = jnp.max(s, axis=-1, keepdims=True)
    e = jnp.exp(s - m)
    denom = jnp.sum(e, axis=-1, keepdims=True)
    attn = e * pl.reciprocal(denom, approx=False)              # (Tq, S) f32

    # dropout(p=0.0) is the identity

    # --- attention @ V (operands in input dtype, f32 accumulation) -----------
    out = jnp.dot(attn.astype(v_ref.dtype), v_ref[0],
                  preferred_element_type=jnp.float32)          # (Tq, D)

    out_ref[0] = out.astype(out_ref.dtype)
    dot_ref[0] = attn.astype(dot_ref.dtype)


def _pick_query_tile(t, seq_len, max_tile=256):
    # A query tile dim must either equal the full array extent or be a multiple
    # of 8 (sublane granularity). Cap at max_tile to bound VMEM on v7x (64 MiB).
    if t <= max_tile and (t == seq_len or t % 8 == 0):
        return t
    return min(max_tile, ((t + 7) // 8) * 8)


def full_qk_attention(qk, v, query_len=None, causal=False, query_tile=256):
    b, seq_len, dim = qk.shape
    t = seq_len if query_len is None else query_len
    tq = _pick_query_tile(t, seq_len, query_tile)
    nq = pl.cdiv(t, tq)

    kernel = partial(_full_qk_attn_kernel, query_len=t, seq_len=seq_len,
                     dim=dim, tq=tq, causal=causal)

    out, dot = pl.pallas_call(
        kernel,
        out_shape=(
            jax.ShapeDtypeStruct((b, t, dim), qk.dtype),
            jax.ShapeDtypeStruct((b, t, seq_len), qk.dtype),
        ),
        grid_spec=pltpu.PrefetchScalarGridSpec(
            num_scalar_prefetch=0,
            grid=(b, nq),
            in_specs=[
                # full qk block — same block index across the query-tile axis,
                # so keys stay resident in VMEM for the whole query loop
                pl.BlockSpec((1, seq_len, dim), lambda i, qi: (i, 0, 0)),
                # query tile (same underlying array, tiled along the query axis;
                # kept as a separate padded spec so ragged t never reads OOB)
                pl.BlockSpec((1, tq, dim), lambda i, qi: (i, qi, 0)),
                # full v block — resident across the query-tile axis
                pl.BlockSpec((1, seq_len, dim), lambda i, qi: (i, 0, 0)),
            ],
            out_specs=[
                pl.BlockSpec((1, tq, dim), lambda i, qi: (i, qi, 0)),
                pl.BlockSpec((1, tq, seq_len), lambda i, qi: (i, qi, 0)),
            ],
            scratch_shapes=[pltpu.VMEM((seq_len, dim), qk.dtype)],
        ),
        compiler_params=pltpu.CompilerParams(
            # batch is "parallel" (megacore sharding on v7x); the query-tile
            # axis is "arbitrary" because the normalized-key scratch is
            # initialized at the first tile of each batch element.
            dimension_semantics=("parallel", "arbitrary"),
            vmem_limit_bytes=64 * 1024 * 1024,
        ),
    )(qk, qk, v)

    return out, dot, jnp.empty((0,), dtype=qk.dtype)


def _reference(qk, v, query_len=None, causal=False):
    # Pure-JAX reference mirroring the PyTorch forward.
    b, seq_len, dim = qk.shape
    t = seq_len if query_len is None else query_len
    q = qk[:, :t]
    norm = jnp.sqrt(jnp.sum(qk * qk, axis=-1, keepdims=True))
    qk_n = qk / jnp.maximum(norm, 1e-12)
    dot = jnp.einsum('bie,bje->bij', q, qk_n) * dim ** (-0.5)
    i = jnp.arange(t)
    dot = dot.at[:, i, i].set(TOKEN_SELF_ATTN_VALUE)
    if causal:
        row = jnp.arange(t)[:, None]
        col = jnp.arange(seq_len)[None, :]
        dot = jnp.where((col < t) & (col > row), -jnp.finfo(dot.dtype).max, dot)
    dot = jax.nn.softmax(dot, axis=-1)
    out = jnp.einsum('bij,bje->bie', dot, v)
    return out, dot


if __name__ == "__main__":
    key = jax.random.PRNGKey(0)
    k1, k2 = jax.random.split(key)
    b, seq, dim = 2, 8, 32
    qk = jax.random.normal(k1, (b, seq, dim), dtype=jnp.float32)
    v = jax.random.normal(k2, (b, seq, dim), dtype=jnp.float32)

    for causal in (False, True):
        out, dot, empty = full_qk_attention(qk, v, causal=causal)
        jax.block_until_ready(out)
        jax.block_until_ready(dot)

        out_ref, dot_ref = _reference(qk, v, causal=causal)
        assert jnp.allclose(out, out_ref, atol=1e-4, rtol=1e-4), f"out mismatch (causal={causal})"
        assert jnp.allclose(dot, dot_ref, atol=1e-4, rtol=1e-4), f"dot mismatch (causal={causal})"
        assert empty.shape == (0,)

    print("KERNEL_OK")
</pallas_src>

<mosaic_0001>
module attributes {stable_mosaic.version = 11 : i64} {
  func.func @_full_qk_attn_kernel(%arg0: i32, %arg1: i32, %arg2: memref<1x8x32xf32, #tpu.memory_space<vmem>>, %arg3: memref<1x8x32xf32, #tpu.memory_space<vmem>>, %arg4: memref<1x8x32xf32, #tpu.memory_space<vmem>>, %arg5: memref<1x8x32xf32, #tpu.memory_space<vmem>>, %arg6: memref<1x8x8xf32, #tpu.memory_space<vmem>>, %arg7: memref<8x32xf32, #tpu.memory_space<vmem>>) attributes {dimension_semantics = [#tpu.dimension_semantics<parallel>, #tpu.dimension_semantics<arbitrary>], iteration_bounds = array<i64: 2, 1>, scalar_prefetch = 0 : i64, scratch_operands = 1 : i64, tpu.core_type = #tpu.core_type<tc>, window_params = [{transform_indices = @transform_0, window_bounds = array<i64: 1, 8, 32>}, {transform_indices = @transform_1, window_bounds = array<i64: 1, 8, 32>}, {transform_indices = @transform_2, window_bounds = array<i64: 1, 8, 32>}, {transform_indices = @transform_3, window_bounds = array<i64: 1, 8, 32>}, {transform_indices = @transform_4, window_bounds = array<i64: 1, 8, 8>}]} {
    %c0_i32 = arith.constant 0 : i32
    %0 = arith.cmpi eq, %arg1, %c0_i32 : i32
    %1 = arith.extui %0 : i1 to i32
    %c0_i32_0 = arith.constant 0 : i32
    %2 = arith.cmpi ne, %1, %c0_i32_0 : i32
    scf.if %2 {
      %c0_18 = arith.constant 0 : index
      %c0_19 = arith.constant 0 : index
      %c0_20 = arith.constant 0 : index
      %34 = vector.load %arg2[%c0_18, %c0_19, %c0_20] : memref<1x8x32xf32, #tpu.memory_space<vmem>>, vector<1x8x32xf32>
      %35 = vector.shape_cast %34 : vector<1x8x32xf32> to vector<8x32xf32>
      %36 = arith.mulf %35, %35 : vector<8x32xf32>
      %cst_21 = arith.constant dense<0.000000e+00> : vector<8xf32>
      %37 = vector.multi_reduction <add>, %36, %cst_21 [1] : vector<8x32xf32> to vector<8xf32>
      %38 = vector.shape_cast %37 : vector<8xf32> to vector<8x1xf32>
      %cst_22 = arith.constant 1.000000e-24 : f32
      %39 = vector.broadcast %cst_22 : f32 to vector<8x1xf32>
      %40 = arith.maximumf %38, %39 : vector<8x1xf32>
      %41 = math.rsqrt %40 : vector<8x1xf32>
      %cst_23 = arith.constant 0.176776692 : f32
      %42 = vector.broadcast %cst_23 : f32 to vector<8x1xf32>
      %43 = arith.mulf %41, %42 : vector<8x1xf32>
      %44 = vector.broadcast %43 : vector<8x1xf32> to vector<8x32xf32>
      %45 = arith.mulf %35, %44 : vector<8x32xf32>
      %c0_24 = arith.constant 0 : index
      %c0_25 = arith.constant 0 : index
      %46 = vector.load %arg7[%c0_24, %c0_25] : memref<8x32xf32, #tpu.memory_space<vmem>>, vector<8x32xf32>
      tpu.vector_store %arg7[%c0_24, %c0_25], %45 {strides = array<i32>} : memref<8x32xf32, #tpu.memory_space<vmem>>, vector<8x32xf32>,
    } else {
    }
    %c0 = arith.constant 0 : index
    %c0_1 = arith.constant 0 : index
    %c0_2 = arith.constant 0 : index
    %3 = vector.load %arg3[%c0, %c0_1, %c0_2] : memref<1x8x32xf32, #tpu.memory_space<vmem>>, vector<1x8x32xf32>
    %4 = vector.shape_cast %3 : vector<1x8x32xf32> to vector<8x32xf32>
    %c0_3 = arith.constant 0 : index
    %c0_4 = arith.constant 0 : index
    %5 = vector.load %arg7[%c0_3, %c0_4] : memref<8x32xf32, #tpu.memory_space<vmem>>, vector<8x32xf32>
    %cst = arith.constant dense<0.000000e+00> : vector<8x8xf32>
    %6 = tpu.matmul %4, %5, %cst {dimension_numbers = #tpu.dot_dimension_numbers<[1], [1], [0], [0], [0, 0, 1, 0], [], []>} : vector<8x32xf32>, vector<8x32xf32>, vector<8x8xf32> -> vector<8x8xf32>
    %c8_i32 = arith.constant 8 : i32
    %7 = arith.muli %arg1, %c8_i32 : i32
    %8 = tpu.iota {dimensions = array<i32: 0>} : vector<8x8xi32>
    %9 = vector.broadcast %7 : i32 to vector<8x8xi32>
    %10 = arith.addi %9, %8 : vector<8x8xi32>
    %11 = tpu.iota {dimensions = array<i32: 1>} : vector<8x8xi32>
    %12 = arith.cmpi eq, %11, %10 : vector<8x8xi32>
    %cst_5 = arith.constant -5.000000e+04 : f32
    %13 = vector.broadcast %cst_5 : f32 to vector<8x8xf32>
    %14 = arith.select %12, %13, %6 : vector<8x8xi1>, vector<8x8xf32>
    %cst_6 = arith.constant dense<0xFF800000> : vector<8xf32>
    %15 = vector.multi_reduction <maximumf>, %14, %cst_6 [1] : vector<8x8xf32> to vector<8xf32>
    %16 = vector.shape_cast %15 : vector<8xf32> to vector<8x1xf32>
    %17 = vector.broadcast %16 : vector<8x1xf32> to vector<8x8xf32>
    %18 = arith.subf %14, %17 : vector<8x8xf32>
    %19 = math.exp %18 : vector<8x8xf32>
    %cst_7 = arith.constant dense<0.000000e+00> : vector<8xf32>
    %20 = vector.multi_reduction <add>, %19, %cst_7 [1] : vector<8x8xf32> to vector<8xf32>
    %21 = vector.shape_cast %20 : vector<8xf32> to vector<8x1xf32>
    %22 = tpu.reciprocal %21 : vector<8x1xf32> -> vector<8x1xf32>
    %23 = vector.broadcast %22 : vector<8x1xf32> to vector<8x8xf32>
    %24 = arith.mulf %19, %23 : vector<8x8xf32>
    %c0_8 = arith.constant 0 : index
    %c0_9 = arith.constant 0 : index
    %c0_10 = arith.constant 0 : index
    %25 = vector.load %arg4[%c0_8, %c0_9, %c0_10] : memref<1x8x32xf32, #tpu.memory_space<vmem>>, vector<1x8x32xf32>
    %26 = vector.shape_cast %25 : vector<1x8x32xf32> to vector<8x32xf32>
    %cst_11 = arith.constant dense<0.000000e+00> : vector<8x32xf32>
    %27 = tpu.matmul %24, %26, %cst_11 {dimension_numbers = #tpu.dot_dimension_numbers<[1], [0], [0], [1], [0, 0, 1, 1], [], []>} : vector<8x8xf32>, vector<8x32xf32>, vector<8x32xf32> -> vector<8x32xf32>
    %c0_12 = arith.constant 0 : index
    %c0_13 = arith.constant 0 : index
    %c0_14 = arith.constant 0 : index
    %28 = vector.load %arg5[%c0_12, %c0_13, %c0_14] : memref<1x8x32xf32, #tpu.memory_space<vmem>>, vector<1x8x32xf32>
    %29 = vector.shape_cast %28 : vector<1x8x32xf32> to vector<8x32xf32>
    %30 = vector.shape_cast %27 : vector<8x32xf32> to vector<1x8x32xf32>
    tpu.vector_store %arg5[%c0_12, %c0_13, %c0_14], %30 {strides = array<i32>} : memref<1x8x32xf32, #tpu.memory_space<vmem>>, vector<1x8x32xf32>,
    %c0_15 = arith.constant 0 : index
    %c0_16 = arith.constant 0 : index
    %c0_17 = arith.constant 0 : index
    %31 = vector.load %arg6[%c0_15, %c0_16, %c0_17] : memref<1x8x8xf32, #tpu.memory_space<vmem>>, vector<1x8x8xf32>
    %32 = vector.shape_cast %31 : vector<1x8x8xf32> to vector<8x8xf32>
    %33 = vector.shape_cast %24 : vector<8x8xf32> to vector<1x8x8xf32>
    tpu.vector_store %arg6[%c0_15, %c0_16, %c0_17], %33 {strides = array<i32>} : memref<1x8x8xf32, #tpu.memory_space<vmem>>, vector<1x8x8xf32>,
    return
  }
  func.func @transform_0(%arg0: i32, %arg1: i32) -> (i32, i32, i32) {
    %c0_i32 = arith.constant 0 : i32
    %c0_i32_0 = arith.constant 0 : i32
    %c0_i32_1 = arith.constant 0 : i32
    return %arg0, %c0_i32, %c0_i32_0 : i32, i32, i32
  }
  func.func @transform_1(%arg0: i32, %arg1: i32) -> (i32, i32, i32) {
    %c0_i32 = arith.constant 0 : i32
    %c0_i32_0 = arith.constant 0 : i32
    return %arg0, %arg1, %c0_i32 : i32, i32, i32
  }
  func.func @transform_2(%arg0: i32, %arg1: i32) -> (i32, i32, i32) {
    %c0_i32 = arith.constant 0 : i32
    %c0_i32_0 = arith.constant 0 : i32
    %c0_i32_1 = arith.constant 0 : i32
    return %arg0, %c0_i32, %c0_i32_0 : i32, i32, i32
  }
  func.func @transform_3(%arg0: i32, %arg1: i32) -> (i32, i32, i32) {
    %c0_i32 = arith.constant 0 : i32
    %c0_i32_0 = arith.constant 0 : i32
    return %arg0, %arg1, %c0_i32 : i32, i32, i32
  }
  func.func @transform_4(%arg0: i32, %arg1: i32) -> (i32, i32, i32) {
    %c0_i32 = arith.constant 0 : i32
    %c0_i32_0 = arith.constant 0 : i32
    return %arg0, %arg1, %c0_i32 : i32, i32, i32
  }
}

</mosaic_0001>

<llo_original>
// kernel: tpu_custom_call.1
$region0: #{tpu_custom_call.1}
  #allocation0 [shape = 'u32[]', space=smem, size = 0x4, offset = 0x4, fixed_abs, tag = 'smem constant byte address 0x4 - core index']
  #allocation1 [shape = 'u32[144,128]{1,0:T(1,128)}', space=vmem, size = 0x12000, scoped, tag = 'internal scratch']
  #allocation2 [shape = 'f32[8,32]{1,0:T(8,128)}', space=vmem, size = 0x1000, scoped, tag = 'scratch operand']
  %s0 = inlined_call_operand.hbm [shape: f32[2,8,32], index: 0, kind: input, shape index: {}]
  %s1 = inlined_call_operand.hbm [shape: f32[2,8,32], index: 1, kind: input, shape index: {}]
  %s2 = inlined_call_operand.hbm [shape: f32[2,8,32], index: 2, kind: input, shape index: {}]
  %s3 = inlined_call_operand.hbm [shape: f32[2,8,32], index: 3, kind: output, shape index: {0}]
  %s4 = inlined_call_operand.hbm [shape: f32[2,8,8], index: 4, kind: output, shape index: {1}]
  %5 = xla_tuple %s3, %s4
  %s6 = sld [smem:[#allocation0]]
  $region69: #{tpu_custom_call.1} parent=0
    _
  %s8 = ssub.s32 1, %s6
  %s9 = scalar_select 0, %s8, %s6
  $region1: #{tpu_custom_call.1} parent=0
    #allocation3 [shape = 'u8[8192]{0}', space=vmem, size = 0x2000, scoped, tag = 'input window, operand 0']
    #allocation4 [shape = 's32[2]{0}', space=sflag, size = 0x8, scoped, tag = 'scoped memory for tpu_custom_call.1']
    #allocation5 [shape = 's32[2]{0}', space=sflag, size = 0x8, scoped, tag = 'scoped memory for tpu_custom_call.1']
    #allocation6 [shape = 'u8[8192]{0}', space=vmem, size = 0x2000, scoped, tag = 'input window, operand 1']
    #allocation7 [shape = 's32[2]{0}', space=sflag, size = 0x8, scoped, tag = 'scoped memory for tpu_custom_call.1']
    #allocation8 [shape = 'u8[8192]{0}', space=vmem, size = 0x2000, scoped, tag = 'input window, operand 2']
    #allocation9 [shape = 'u8[8192]{0}', space=vmem, size = 0x2000, scoped, tag = 'output window, operand 0']
    #allocation10 [shape = 'u8[8192]{0}', space=vmem, size = 0x2000, scoped, tag = 'output window, operand 1']
    #allocation11 [shape = 's32[2]{0}', space=sflag, size = 0x8, scoped, tag = 'scoped memory for tpu_custom_call.1']
    %10 = vsyncpa [#allocation4], 0
    %s11 = scalar_lea.sflag [#allocation4], 1
    %12 = vsyncpa %s11, 0
    %13 = vsyncpa [#allocation7], 0
    %s14 = scalar_lea.sflag [#allocation7], 1
    %15 = vsyncpa %s14, 0
    %16 = vsyncpa [#allocation5], 0
    %s17 = scalar_lea.sflag [#allocation5], 1
    %18 = vsyncpa %s17, 0
    %19 = vsyncpa [#allocation11], 0
    %s20 = scalar_lea.sflag [#allocation11], 1
    %21 = vsyncpa %s20, 0
    loop: start=0, step=1, limit=4
    $region2: #{tpu_custom_call.1} parent=1 // loop_pre_header
      _
    $region3: #{tpu_custom_call.1} parent=1 // loop_header
      %s23 = sphi 0, %s27
      %p24 = scmp.ge.s32.totalorder %s23, 4
      %s30 = sphi 0, %s42
      %s31 = sphi 0, %s38
      %s32 = sphi 0, %s30
      %s33 = sphi 0, %s31
      %s34 = sphi 0, %s32
      %s35 = sphi 0, %s33
      %s45 = sphi 0, %s47
      %s48 = sphi 0, %s45
      %s49 = sphi 0, %s48
      %s65 = sphi 0, %s49
      %s73 = sphi 0, %s75
      %s76 = sphi 0, %s73
      %s77 = sphi 0, %s76
      %s93 = sphi 0, %s77
      %s99 = sphi 0, %s101
      %s102 = sphi 0, %s99
      %s103 = sphi 0, %s102
      %s119 = sphi 0, %s103
      %s127 = sphi 0, %s129
      %s130 = sphi 0, %s127
      %s131 = sphi 0, %s130
      %s147 = sphi 0, %s131
      %s155 = sphi 0, %s157
      %s158 = sphi 0, %s155
      %s159 = sphi 0, %s158
      %s175 = sphi 0, %s159
    $region4: #{tpu_custom_call.1} parent=1 // loop_header_branch
      %26 = sbr.rel (%p24) target = $region8
    $region5: #{tpu_custom_call.1} parent=1 // loop_body
      %s28 = ssub.s32 %s23, 1
      %s29 = ssub.s32 %s23, 2
      %s36 = sadd.s32 1, %s31
      %p37 = scmp.ge.s32.totalorder %s36, 1
      %s38 = scalar_select %p37, 0, %s36
      %s39 = sadd.s32 1, %s30
      %s40 = scalar_select %p37, %s39, %s30
      %p41 = scmp.ge.s32.totalorder %s40, 2
      %s42 = scalar_select %p41, 0, %s40
      %s43 = ssub.s32 %s30, %s42
      %p44 = scmp.eq.s32.totalorder %s43, 0
      %s46 = sadd.s32 %s45, 1
      %s47 = scalar_select %p44, %s45, %s46
      %p50 = pneg %p44
      %p51 = scmp.eq.s32.totalorder %s23, 1
      %p52 = por %p50, %p51
      %p53 = scmp.ne.s32.totalorder %s45, %s48
      %p54 = scmp.eq.s32.totalorder %s23, 0
      %p55 = por %p53, %p54
      %p56 = scmp.ne.s32.totalorder %s45, %s48
      %p57 = scmp.eq.s32.totalorder %s28, 1
      %p58 = por %p56, %p57
      %p59 = scmp.ne.s32.totalorder %s48, %s49
      %p60 = scmp.eq.s32.totalorder %s28, 0
      %p61 = por %p59, %p60
      %p62 = scmp.ne.s32.totalorder %s48, %s49
      %p63 = scmp.eq.s32.totalorder %s29, 1
      %p64 = por %p62, %p63
      %p66 = scmp.ne.s32.totalorder %s49, %s65
      %p67 = scmp.eq.s32.totalorder %s29, 0
      %p68 = por %p66, %p67
      %s69 = ssub.s32 %s30, %s42
      %s70 = ssub.s32 %s31, %s38
      %s71 = sor.u32 %s69, %s70
      %p72 = scmp.eq.s32.totalorder %s71, 0
      %s74 = sadd.s32 %s73, 1
      %s75 = scalar_select %p72, %s73, %s74
      %p78 = pneg %p72
      %p79 = scmp.eq.s32.totalorder %s23, 1
      %p80 = por %p78, %p79
      %p81 = scmp.ne.s32.totalorder %s73, %s76
      %p82 = scmp.eq.s32.totalorder %s23, 0
      %p83 = por %p81, %p82
      %p84 = scmp.ne.s32.totalorder %s73, %s76
      %p85 = scmp.eq.s32.totalorder %s28, 1
      %p86 = por %p84, %p85
      %p87 = scmp.ne.s32.totalorder %s76, %s77
      %p88 = scmp.eq.s32.totalorder %s28, 0
      %p89 = por %p87, %p88
      %p90 = scmp.ne.s32.totalorder %s76, %s77
      %p91 = scmp.eq.s32.totalorder %s29, 1
      %p92 = por %p90, %p91
      %p94 = scmp.ne.s32.totalorder %s77, %s93
      %p95 = scmp.eq.s32.totalorder %s29, 0
      %p96 = por %p94, %p95
      %s97 = ssub.s32 %s30, %s42
      %p98 = scmp.eq.s32.totalorder %s97, 0
      %s100 = sadd.s32 %s99, 1
      %s101 = scalar_select %p98, %s99, %s100
      %p104 = pneg %p98
      %p105 = scmp.eq.s32.totalorder %s23, 1
      %p106 = por %p104, %p105
      %p107 = scmp.ne.s32.totalorder %s99, %s102
      %p108 = scmp.eq.s32.totalorder %s23, 0
      %p109 = por %p107, %p108
      %p110 = scmp.ne.s32.totalorder %s99, %s102
      %p111 = scmp.eq.s32.totalorder %s28, 1
      %p112 = por %p110, %p111
      %p113 = scmp.ne.s32.totalorder %s102, %s103
      %p114 = scmp.eq.s32.totalorder %s28, 0
      %p115 = por %p113, %p114
      %p116 = scmp.ne.s32.totalorder %s102, %s103
      %p117 = scmp.eq.s32.totalorder %s29, 1
      %p118 = por %p116, %p117
      %p120 = scmp.ne.s32.totalorder %s103, %s119
      %p121 = scmp.eq.s32.totalorder %s29, 0
      %p122 = por %p120, %p121
      %s123 = ssub.s32 %s30, %s42
      %s124 = ssub.s32 %s31, %s38
      %s125 = sor.u32 %s123, %s124
      %p126 = scmp.eq.s32.totalorder %s125, 0
      %s128 = sadd.s32 %s127, 1
      %s129 = scalar_select %p126, %s127, %s128
      %p132 = pneg %p126
      %p133 = scmp.eq.s32.totalorder %s23, 1
      %p134 = por %p132, %p133
      %p135 = scmp.ne.s32.totalorder %s127, %s130
      %p136 = scmp.eq.s32.totalorder %s23, 0
      %p137 = por %p135, %p136
      %p138 = scmp.ne.s32.totalorder %s127, %s130
      %p139 = scmp.eq.s32.totalorder %s28, 1
      %p140 = por %p138, %p139
      %p141 = scmp.ne.s32.totalorder %s130, %s131
      %p142 = scmp.eq.s32.totalorder %s28, 0
      %p143 = por %p141, %p142
      %p144 = scmp.ne.s32.totalorder %s130, %s131
      %p145 = scmp.eq.s32.totalorder %s29, 1
      %p146 = por %p144, %p145
      %p148 = scmp.ne.s32.totalorder %s131, %s147
      %p149 = scmp.eq.s32.totalorder %s29, 0
      %p150 = por %p148, %p149
      %s151 = ssub.s32 %s30, %s42
      %s152 = ssub.s32 %s31, %s38
      %s153 = sor.u32 %s151, %s152
      %p154 = scmp.eq.s32.totalorder %s153, 0
      %s156 = sadd.s32 %s155, 1
      %s157 = scalar_select %p154, %s155, %s156
      %p160 = pneg %p154
      %p161 = scmp.eq.s32.totalorder %s23, 1
      %p162 = por %p160, %p161
      %p163 = scmp.ne.s32.totalorder %s155, %s158
      %p164 = scmp.eq.s32.totalorder %s23, 0
      %p165 = por %p163, %p164
      %p166 = scmp.ne.s32.totalorder %s155, %s158
      %p167 = scmp.eq.s32.totalorder %s28, 1
      %p168 = por %p166, %p167
      %p169 = scmp.ne.s32.totalorder %s158, %s159
      %p170 = scmp.eq.s32.totalorder %s28, 0
      %p171 = por %p169, %p170
      %p172 = scmp.ne.s32.totalorder %s158, %s159
      %p173 = scmp.eq.s32.totalorder %s29, 1
      %p174 = por %p172, %p173
      %p176 = scmp.ne.s32.totalorder %s159, %s175
      %p177 = scmp.eq.s32.totalorder %s29, 0
      %p178 = por %p176, %p177
      %p179 = scmp.le.s32.totalorder 1, %s23
      %p180 = scmp.lt.s32.totalorder %s23, 3
      %p181 = pnand %p179, %p180
      %p182 = pneg %p181
      // Predicated region
      $region9: #{tpu_custom_call.1} parent=5 // pred_check
        _
      $region10: #{tpu_custom_call.1} parent=5 // pred_check_branch
        %184 = sbr.rel (%p181) target = $region12
      $region11: #{tpu_custom_call.1} parent=5 // pred_region
        %s185 = ssub.s32 %s23, 1
      $region12: #{tpu_custom_call.1} parent=5 // pred_fallthru
        _
      %p186 = scmp.lt.s32.totalorder %s23, 2
      // Predicated region
      $region13: #{tpu_custom_call.1} parent=5 // pred_check
        %p187 = pneg %p186
      $region14: #{tpu_custom_call.1} parent=5 // pred_check_branch
        %189 = sbr.rel (%p187) target = $region16
      $region15: #{tpu_custom_call.1} parent=5 // pred_region
        // Predicated region
        $region17: #{tpu_custom_call.1} parent=15 // pred_check
          %p190 = pneg %p55
        $region18: #{tpu_custom_call.1} parent=15 // pred_check_branch
          %192 = sbr.rel (%p190) target = $region20
        $region19: #{tpu_custom_call.1} parent=15 // pred_region
          %s193 = sand.u32 %s45, 1
          %s194 = scalar_lea.sflag [#allocation4], %s193
          %s195 = sand.u32 %s45, 1
          %s196 = smul.addr %s195, 8
          %s197 = scalar_lea.vmem [#allocation3], %s196
          %s199 = ssub.s32 128, 128
          %200 = vsyncadd %s194, %s199
          %s201 = smul.addr %s30, 128
          %s202 = scalar_lea.hbm %s0, %s201
          %s204 = sshll.u32 %s197, 4
          %s205 = int_to_ptr.vmem [resolvable:$true] %s204
          %207 = dma.hbm_to_vmem [thread:$0]  %s202, 128, %s205, %s194
        $region20: #{tpu_custom_call.1} parent=15 // pred_fallthru
          _
        // Predicated region
        $region21: #{tpu_custom_call.1} parent=15 // pred_check
          %p208 = pneg %p83
        $region22: #{tpu_custom_call.1} parent=15 // pred_check_branch
          %210 = sbr.rel (%p208) target = $region24
        $region23: #{tpu_custom_call.1} parent=15 // pred_region
          %s211 = sand.u32 %s23, 1
          %s212 = scalar_lea.sflag [#allocation7], %s211
          %s213 = sand.u32 %s73, 1
          %s214 = smul.addr %s213, 8
          %s215 = scalar_lea.vmem [#allocation6], %s214
          %s217 = ssub.s32 128, 128
          %218 = vsyncadd %s212, %s217
          %s219 = sadd.s32 %s31, %s30
          %s220 = smul.addr %s219, 128
          %s221 = scalar_lea.hbm %s1, %s220
          %s223 = sshll.u32 %s215, 4
          %s224 = int_to_ptr.vmem [resolvable:$true] %s223
          %226 = dma.hbm_to_vmem [thread:$0]  %s221, 128, %s224, %s212
        $region24: #{tpu_custom_call.1} parent=15 // pred_fallthru
          _
        // Predicated region
        $region25: #{tpu_custom_call.1} parent=15 // pred_check
          %p227 = pneg %p109
        $region26: #{tpu_custom_call.1} parent=15 // pred_check_branch
          %229 = sbr.rel (%p227) target = $region28
        $region27: #{tpu_custom_call.1} parent=15 // pred_region
          %s230 = sand.u32 %s23, 1
          %s231 = scalar_lea.sflag [#allocation7], %s230
          %s232 = sand.u32 %s99, 1
          %s233 = smul.addr %s232, 8
          %s234 = scalar_lea.vmem [#allocation8], %s233
          %s236 = ssub.s32 128, 128
          %237 = vsyncadd %s231, %s236
          %s238 = smul.addr %s30, 128
          %s239 = scalar_lea.hbm %s2, %s238
          %s241 = sshll.u32 %s234, 4
          %s242 = int_to_ptr.vmem [resolvable:$true] %s241
          %244 = dma.hbm_to_vmem [thread:$0]  %s239, 128, %s242, %s231
        $region28: #{tpu_custom_call.1} parent=15 // pred_fallthru
          _
      $region16: #{tpu_custom_call.1} parent=5 // pred_fallthru
        _
      %p245 = scmp.le.s32.totalorder 1, %s23
      %p246 = scmp.lt.s32.totalorder %s23, 3
      %p247 = pnand %p245, %p246
      %p248 = pneg %p247
      // Predicated region
      $region29: #{tpu_custom_call.1} parent=5 // pred_check
        _
      $region30: #{tpu_custom_call.1} parent=5 // pred_check_branch
        %250 = sbr.rel (%p247) target = $region32
      $region31: #{tpu_custom_call.1} parent=5 // pred_region
        %s251 = ssub.s32 %s23, 1
        %s252 = sand.u32 %s48, 1
        %s253 = scalar_lea.sflag [#allocation4], %s252
        %s254 = sand.u32 %s48, 1
        %s255 = smul.addr %s254, 8
        %s256 = scalar_lea.vmem [#allocation3], %s255
        // Predicated region
        $region33: #{tpu_custom_call.1} parent=31 // pred_check
          %p257 = pneg %p61
        $region34: #{tpu_custom_call.1} parent=31 // pred_check_branch
          %259 = sbr.rel (%p257) target = $region36
        $region35: #{tpu_custom_call.1} parent=31 // pred_region
          %260 = dma.done %s253, 128
        $region36: #{tpu_custom_call.1} parent=31 // pred_fallthru
          _
        %s261 = sand.u32 %s28, 1
        %s262 = scalar_lea.sflag [#allocation7], %s261
        %s263 = sand.u32 %s76, 1
        %s264 = smul.addr %s263, 8
        %s265 = scalar_lea.vmem [#allocation6], %s264
        // Predicated region
        $region37: #{tpu_custom_call.1} parent=31 // pred_check
          %p266 = pneg %p89
        $region38: #{tpu_custom_call.1} parent=31 // pred_check_branch
          %268 = sbr.rel (%p266) target = $region40
        $region39: #{tpu_custom_call.1} parent=31 // pred_region
          %269 = dma.done %s262, 128
        $region40: #{tpu_custom_call.1} parent=31 // pred_fallthru
          _
        %s270 = sand.u32 %s28, 1
        %s271 = scalar_lea.sflag [#allocation7], %s270
        %s272 = sand.u32 %s102, 1
        %s273 = smul.addr %s272, 8
        %s274 = scalar_lea.vmem [#allocation8], %s273
        // Predicated region
        $region41: #{tpu_custom_call.1} parent=31 // pred_check
          %p275 = pneg %p115
        $region42: #{tpu_custom_call.1} parent=31 // pred_check_branch
          %277 = sbr.rel (%p275) target = $region44
        $region43: #{tpu_custom_call.1} parent=31 // pred_region
          %278 = dma.done %s271, 128
        $region44: #{tpu_custom_call.1} parent=31 // pred_fallthru
          _
        %s279 = sand.u32 %s48, 1
        %s280 = scalar_lea.sflag [#allocation4], %s279
        %s281 = sand.u32 %s48, 1
        %s282 = smul.addr %s281, 8
        %s283 = scalar_lea.vmem [#allocation3], %s282
        %p284 = pneg %p61
        %p285 = pneg %p58
        %s286 = sand.u32 %s28, 1
        %s287 = scalar_lea.sflag [#allocation7], %s286
        %s288 = sand.u32 %s76, 1
        %s289 = smul.addr %s288, 8
        %s290 = scalar_lea.vmem [#allocation6], %s289
        %p291 = pneg %p89
        %p292 = pneg %p86
        %s293 = sand.u32 %s28, 1
        %s294 = scalar_lea.sflag [#allocation7], %s293
        %s295 = sand.u32 %s102, 1
        %s296 = smul.addr %s295, 8
        %s297 = scalar_lea.vmem [#allocation8], %s296
        %p298 = pneg %p115
        %p299 = pneg %p112
        %p300 = pneg %p143
        %p301 = pneg %p140
        %s302 = sand.u32 %s130, 1
        %s303 = scalar_lea.sflag [#allocation5], %s302
        %s304 = sand.u32 %s130, 1
        %s305 = smul.addr %s304, 8
        %s306 = scalar_lea.vmem [#allocation9], %s305
        %p307 = pneg %p171
        %p308 = pneg %p168
        %s309 = sand.u32 %s158, 1
        %s310 = scalar_lea.sflag [#allocation11], %s309
        %s311 = sand.u32 %s158, 1
        %s312 = smul.addr %s311, 8
        %s313 = scalar_lea.vmem [#allocation10], %s312
        %p314 = scmp.eq.s32.totalorder %s33, 0
        // Predicated region
        $region45: #{tpu_custom_call.1} parent=31 // pred_check
          %p315 = pneg %p314
        $region46: #{tpu_custom_call.1} parent=31 // pred_check_branch
          %317 = sbr.rel (%p315) target = $region48
        $region47: #{tpu_custom_call.1} parent=31 // pred_region
          %v318 = vld [vmem:[%s256] sm:$0xff]
          %v319 = vmul.f32 %v318, %v318
          %vm320 = vcmask 261120
          %v321 = vsel %vm320, %v319, 0.0
          %322 = vadd.xlane.f32.xlu0 %v321
          %v323 = vpop.xlane.xlu0 %322
          %v324 = vmax.f32 %v323, 1e-24
          %v325 = vrsqrt.pop %v324
          %v326 = vmul.f32 %v325, 0.17677669
          %v327 = vmul.f32 %v318, %v326
          %328 = vst.msk [vmem:[#allocation2] sm:$0xff] %vm320, %v327
        $region48: #{tpu_custom_call.1} parent=31 // pred_fallthru
          _
        %v329 = vld [vmem:[%s265] sm:$0xff]
        %v330 = vld [vmem:[#allocation2] sm:$0xff]
        %vm331 = vcmask 261120
        %v333 = vsel %vm331, %v329, 0
        %v336 = vsel %vm331, %v330, 0
        %338 = vmatprep.subr.mxu0 0.0
        %339 = vmatpush1.xpose.msra.mxu0 %v336
        %340 = vmatprep.subr.mxu0 0.0
        %341 = vmatpush1.xpose.msra.mxu0 0.0
        %342 = vmatprep.subr.mxu0 0.0
        %343 = vmatpush1.xpose.msra.mxu0 0.0
        %344 = vmatprep.subr.mxu0 0.0
        %345 = vmatpush1.xpose.msra.mxu0 0.0
        %346 = vmatprep.subr.mxu0 0.0
        %347 = vmatpush1.xpose.msra.mxu0 0.0
        %348 = vmatprep.subr.mxu0 0.0
        %349 = vmatpush1.xpose.msra.mxu0 0.0
        %350 = vmatprep.subr.mxu0 0.0
        %351 = vmatpush1.xpose.msra.mxu0 0.0
        %352 = vmatprep.subr.mxu0 0.0
        %353 = vmatpush1.xpose.msra.mxu0 0.0
        %354 = vmatprep.subr.mxu0 0.0
        %355 = vmatpush1.xpose.msra.mxu0 0.0
        %356 = vmatprep.subr.mxu0 0.0
        %357 = vmatpush1.xpose.msra.mxu0 0.0
        %358 = vmatprep.subr.mxu0 0.0
        %359 = vmatpush1.xpose.msra.mxu0 0.0
        %360 = vmatprep.subr.mxu0 0.0
        %361 = vmatpush1.xpose.msra.mxu0 0.0
        %362 = vmatprep.subr.mxu0 0.0
        %363 = vmatpush1.xpose.msra.mxu0 0.0
        %364 = vmatprep.subr.mxu0 0.0
        %365 = vmatpush1.xpose.msra.mxu0 0.0
        %366 = vmatprep.subr.mxu0 0.0
        %367 = vmatpush1.xpose.msra.mxu0 0.0
        %368 = vmatprep.subr.mxu0 0.0
        %369 = vmatpush1.xpose.msra.mxu0 0.0
        %370 = vmatprep.subr.mxu0 0.0
        %371 = vmatpush1.xpose.msra.mxu0 0.0
        %372 = vmatprep.subr.mxu0 0.0
        %373 = vmatpush1.xpose.msra.mxu0 0.0
        %374 = vmatprep.subr.mxu0 0.0
        %375 = vmatpush1.xpose.msra.mxu0 0.0
        %376 = vmatprep.subr.mxu0 0.0
        %377 = vmatpush1.xpose.msra.mxu0 0.0
        %378 = vmatprep.subr.mxu0 0.0
        %379 = vmatpush1.xpose.msra.mxu0 0.0
        %380 = vmatprep.subr.mxu0 0.0
        %381 = vmatpush1.xpose.msra.mxu0 0.0
        %382 = vmatprep.subr.mxu0 0.0
        %383 = vmatpush1.xpose.msra.mxu0 0.0
        %384 = vmatprep.subr.mxu0 0.0
        %385 = vmatpush1.xpose.msra.mxu0 0.0
        %386 = vmatprep.subr.mxu0 0.0
        %387 = vmatpush1.xpose.msra.mxu0 0.0
        %388 = vmatprep.subr.mxu0 0.0
        %389 = vmatpush1.xpose.msra.mxu0 0.0
        %390 = vmatprep.subr.mxu0 0.0
        %391 = vmatpush1.xpose.msra.mxu0 0.0
        %392 = vmatprep.subr.mxu0 0.0
        %393 = vmatpush1.xpose.msra.mxu0 0.0
        %394 = vmatprep.subr.mxu0 0.0
        %395 = vmatpush1.xpose.msra.mxu0 0.0
        %396 = vmatprep.subr.mxu0 0.0
        %397 = vmatpush1.xpose.msra.mxu0 0.0
        %398 = vmatprep.subr.mxu0 0.0
        %399 = vmatpush1.xpose.msra.mxu0 0.0
        %400 = vmatprep.subr.mxu0 0.0
        %401 = vmatpush1.xpose.msra.mxu0 0.0
        %402 = vmatprep.mubr.f32.mxu0 0.0
        %403 = vmatmul.mubr.f32.gmra.mrb[0].mxu0 %v333
        %v404 = vpop.f32.mrb[0].mxu0
        %v405 = vadd.f32 0.0, %v404
        %v406 = vpop.f32.mrb[0].mxu0
        %407 = vdwg.mxu0
        %s408 = smul.u32 %s33, 8
        %v409 = vlaneseq
        %v410 = vshrl.u32 %v409, 7
        %v411 = vstv %s408
        %v412 = vadd.s32 %v411, %v410
        %v413 = vlaneseq
        %v414 = vand.u32 %v413, 127
        %vm415 = vcmp.eq.s32.totalorder %v414, %v412
        %v416 = vsel %vm415, -50000.0, %v405
        %vm417 = vcmask 64512
        %v418 = vsel %vm417, %v416, -inf
        %419 = vmax.xlane.f32.xlu0 %v418
        %v420 = vpop.xlane.xlu0 %419
        %v421 = vsub.f32 %v416, %v420
        %v422 = vmul.f32 %v421, 1.442695
        %v423 = vpow.pop %v422
        %v424 = vsel %vm417, %v423, 0.0
        %425 = vadd.xlane.f32.xlu0 %v424
        %v426 = vpop.xlane.xlu0 %425
        %v427 = vrcp.pop %v426
        %v428 = vmul.f32 %v423, %v427
        %v429 = vld [vmem:[%s274] sm:$0xff]
        %v431 = vsel %vm417, %v428, 0
        %433 = vmatprep.subr.mxu0 0.0
        %434 = vmatpush1.msra.mxu0 %v429
        %435 = vmatprep.subr.mxu0 0.0
        %436 = vmatpush1.msra.mxu0 0.0
        %437 = vmatprep.subr.mxu0 0.0
        %438 = vmatpush1.msra.mxu0 0.0
        %439 = vmatprep.subr.mxu0 0.0
        %440 = vmatpush1.msra.mxu0 0.0
        %441 = vmatprep.subr.mxu0 0.0
        %442 = vmatpush1.msra.mxu0 0.0
        %443 = vmatprep.subr.mxu0 0.0
        %444 = vmatpush1.msra.mxu0 0.0
        %445 = vmatprep.subr.mxu0 0.0
        %446 = vmatpush1.msra.mxu0 0.0
        %447 = vmatprep.subr.mxu0 0.0
        %448 = vmatpush1.msra.mxu0 0.0
        %449 = vmatprep.subr.mxu0 0.0
        %450 = vmatpush1.msra.mxu0 0.0
        %451 = vmatprep.subr.mxu0 0.0
        %452 = vmatpush1.msra.mxu0 0.0
        %453 = vmatprep.subr.mxu0 0.0
        %454 = vmatpush1.msra.mxu0 0.0
        %455 = vmatprep.subr.mxu0 0.0
        %456 = vmatpush1.msra.mxu0 0.0
        %457 = vmatprep.subr.mxu0 0.0
        %458 = vmatpush1.msra.mxu0 0.0
        %459 = vmatprep.subr.mxu0 0.0
        %460 = vmatpush1.msra.mxu0 0.0
        %461 = vmatprep.subr.mxu0 0.0
        %462 = vmatpush1.msra.mxu0 0.0
        %463 = vmatprep.subr.mxu0 0.0
        %464 = vmatpush1.msra.mxu0 0.0
        %465 = vmatprep.subr.mxu0 0.0
        %466 = vmatpush1.msra.mxu0 0.0
        %467 = vmatprep.subr.mxu0 0.0
        %468 = vmatpush1.msra.mxu0 0.0
        %469 = vmatprep.subr.mxu0 0.0
        %470 = vmatpush1.msra.mxu0 0.0
        %471 = vmatprep.subr.mxu0 0.0
        %472 = vmatpush1.msra.mxu0 0.0
        %473 = vmatprep.subr.mxu0 0.0
        %474 = vmatpush1.msra.mxu0 0.0
        %475 = vmatprep.subr.mxu0 0.0
        %476 = vmatpush1.msra.mxu0 0.0
        %477 = vmatprep.subr.mxu0 0.0
        %478 = vmatpush1.msra.mxu0 0.0
        %479 = vmatprep.subr.mxu0 0.0
        %480 = vmatpush1.msra.mxu0 0.0
        %481 = vmatprep.subr.mxu0 0.0
        %482 = vmatpush1.msra.mxu0 0.0
        %483 = vmatprep.subr.mxu0 0.0
        %484 = vmatpush1.msra.mxu0 0.0
        %485 = vmatprep.subr.mxu0 0.0
        %486 = vmatpush1.msra.mxu0 0.0
        %487 = vmatprep.subr.mxu0 0.0
        %488 = vmatpush1.msra.mxu0 0.0
        %489 = vmatprep.subr.mxu0 0.0
        %490 = vmatpush1.msra.mxu0 0.0
        %491 = vmatprep.subr.mxu0 0.0
        %492 = vmatpush1.msra.mxu0 0.0
        %493 = vmatprep.subr.mxu0 0.0
        %494 = vmatpush1.msra.mxu0 0.0
        %495 = vmatprep.subr.mxu0 0.0
        %496 = vmatpush1.msra.mxu0 0.0
        %497 = vmatprep.mubr.f32.mxu0 0.0
        %498 = vmatmul.mubr.f32.gmra.mrb[0].mxu0 %v431
        %v499 = vpop.f32.mrb[0].mxu0
        %v500 = vadd.f32 0.0, %v499
        %v501 = vpop.f32.mrb[0].mxu0
        %502 = vdwg.mxu0
        %503 = vst.msk [vmem:[%s306] sm:$0xff] %vm331, %v500
        %504 = vst.msk [vmem:[%s313] sm:$0xff] %vm417, %v428
        %s505 = sand.u32 %s130, 1
        %s506 = scalar_lea.sflag [#allocation5], %s505
        %s507 = sand.u32 %s130, 1
        %s508 = smul.addr %s507, 8
        %s509 = scalar_lea.vmem [#allocation9], %s508
        %s510 = sand.u32 %s158, 1
        %s511 = scalar_lea.sflag [#allocation11], %s510
        %s512 = sand.u32 %s158, 1
        %s513 = smul.addr %s512, 8
        %s514 = scalar_lea.vmem [#allocation10], %s513
        // Predicated region
        $region49: #{tpu_custom_call.1} parent=31 // pred_check
          %p515 = pneg %p140
        $region50: #{tpu_custom_call.1} parent=31 // pred_check_branch
          %517 = sbr.rel (%p515) target = $region52
        $region51: #{tpu_custom_call.1} parent=31 // pred_region
          %s519 = ssub.s32 128, 128
          %520 = vsyncadd %s506, %s519
          %s521 = sadd.s32 %s33, %s32
          %s522 = smul.addr %s521, 128
          %s523 = scalar_lea.hbm %s3, %s522
          %s525 = sshll.u32 %s509, 4
          %s526 = int_to_ptr.vmem [resolvable:$true] %s525
          %528 = dma.vmem_to_hbm [thread:$0]  %s526, 128, %s523, %s506
        $region52: #{tpu_custom_call.1} parent=31 // pred_fallthru
          _
        // Predicated region
        $region53: #{tpu_custom_call.1} parent=31 // pred_check
          %p529 = pneg %p168
        $region54: #{tpu_custom_call.1} parent=31 // pred_check_branch
          %531 = sbr.rel (%p529) target = $region56
        $region55: #{tpu_custom_call.1} parent=31 // pred_region
          %s533 = ssub.s32 128, 128
          %534 = vsyncadd %s511, %s533
          %s535 = sadd.s32 %s33, %s32
          %s536 = smul.addr %s535, 128
          %s537 = scalar_lea.hbm %s4, %s536
          %s539 = sshll.u32 %s514, 4
          %s540 = int_to_ptr.vmem [resolvable:$true] %s539
          %542 = dma.vmem_to_hbm [thread:$0]  %s540, 128, %s537, %s511
        $region56: #{tpu_custom_call.1} parent=31 // pred_fallthru
          _
      $region32: #{tpu_custom_call.1} parent=5 // pred_fallthru
        _
      %p543 = scmp.le.s32.totalorder 2, %s23
      // Predicated region
      $region57: #{tpu_custom_call.1} parent=5 // pred_check
        %p544 = pneg %p543
      $region58: #{tpu_custom_call.1} parent=5 // pred_check_branch
        %546 = sbr.rel (%p544) target = $region60
      $region59: #{tpu_custom_call.1} parent=5 // pred_region
        %s547 = ssub.s32 %s23, 2
        // Predicated region
        $region61: #{tpu_custom_call.1} parent=59 // pred_check
          %p548 = pneg %p146
        $region62: #{tpu_custom_call.1} parent=59 // pred_check_branch
          %550 = sbr.rel (%p548) target = $region64
        $region63: #{tpu_custom_call.1} parent=59 // pred_region
          %s551 = sand.u32 %s131, 1
          %s552 = scalar_lea.sflag [#allocation5], %s551
          %s553 = sand.u32 %s131, 1
          %s554 = smul.addr %s553, 8
          %s555 = scalar_lea.vmem [#allocation9], %s554
          %556 = dma.done %s552, 128
        $region64: #{tpu_custom_call.1} parent=59 // pred_fallthru
          _
        // Predicated region
        $region65: #{tpu_custom_call.1} parent=59 // pred_check
          %p557 = pneg %p174
        $region66: #{tpu_custom_call.1} parent=59 // pred_check_branch
          %559 = sbr.rel (%p557) target = $region68
        $region67: #{tpu_custom_call.1} parent=59 // pred_region
          %s560 = sand.u32 %s159, 1
          %s561 = scalar_lea.sflag [#allocation11], %s560
          %s562 = sand.u32 %s159, 1
          %s563 = smul.addr %s562, 8
          %s564 = scalar_lea.vmem [#allocation10], %s563
          %565 = dma.done %s561, 128
        $region68: #{tpu_custom_call.1} parent=59 // pred_fallthru
          _
      $region60: #{tpu_custom_call.1} parent=5 // pred_fallthru
        _
    $region6: #{tpu_custom_call.1} parent=1 // loop_footer
      %s27 = sadd.s32 1, %s23
    $region7: #{tpu_custom_call.1} parent=1 // loop_footer_branch
      %22 = sbr.rel target = $region3
    $region8: #{tpu_custom_call.1} parent=1 // loop_exit
      _
    %566 = vsyncpa [#allocation4], 1
    %s567 = scalar_lea.sflag [#allocation4], 1
    %568 = vsyncpa %s567, 1
    %569 = vsyncpa [#allocation7], 1
    %s570 = scalar_lea.sflag [#allocation7], 1
    %571 = vsyncpa %s570, 1
    %572 = vsyncpa [#allocation5], 1
    %s573 = scalar_lea.sflag [#allocation5], 1
    %574 = vsyncpa %s573, 1
    %575 = vsyncpa [#allocation11], 1
    %s576 = scalar_lea.sflag [#allocation11], 1
    %577 = vsyncpa %s576, 1

</llo_original>
